<compile_context>
chip_gen: v5e
topology: v5e:2x2
jax: 0.10.0
libtpu: 0.0.40
codegen_flags: <defaults>
</compile_context>

<pallas_src>
import jax
import jax.numpy as jnp
from jax import lax
from jax.experimental import pallas as pl
from jax.experimental.pallas import tpu as pltpu


def _round_up(x, m):
    return ((x + m - 1) // m) * m


def _cdiv(a, b):
    return -(-a // b)


def _fold_to(v, width):
    """Sum lane-aligned chunks of `width` columns: (rows, k*width) -> (rows, width)."""
    n = v.shape[-1] // width
    acc = v[:, 0:width]
    for k in range(1, n):
        acc = acc + v[:, k * width:(k + 1) * width]
    return acc


def _lane_fold(v):
    """Fold (rows, T) -> (rows, 128) with lane-aligned VALU adds (no relayout)."""
    w = v.shape[-1]
    if w > 1024 and w % 1024 == 0:
        v = _fold_to(v, 1024)
        w = 1024
    if w > 128:
        v = _fold_to(v, 128)
    return v


def _vmem_limits():
    """Generation-aware VMEM limit + double-buffered-input budget (bytes)."""
    try:
        info = pltpu.get_tpu_info()
        phys = int(getattr(info, "vmem_capacity_bytes", 0)) or 64 * 1024 * 1024
    except Exception:
        phys = 64 * 1024 * 1024          # conservative (v7x-sized) fallback
    vmem_limit = phys * 3 // 4           # ~96 MiB on v5e/v6e, ~48 MiB on v7x
    in_budget = min(48 * 1024 * 1024, vmem_limit * 3 // 5)
    return vmem_limit, in_budget


def _make_dice_partial_kernel(*, C, G, HW, tile, chunk, nt_core, unroll):
    """Per-(core, batch) lane-wise partial sums.

    Output row layout (width 128):
      rows [0, C)     : sum(x_i * (t == i))   (row 0 unused in finalize)
      rows [G, G+C)   : sum(x_i)
      rows [2G, 2G+C) : sum(t == i)
      row  3G         : sum(Un0 * Un_GT)
      row  3G+1       : sum(Un0)
      row  3G+2       : sum(Un_GT)
    """
    nchunk = tile // chunk

    def kernel(x_ref, t_ref, u_ref, out_ref):
        core = pl.program_id(0)
        j = pl.program_id(2)
        gt = core * nt_core + j          # global spatial-tile index (unclamped)
        base = gt * tile                 # element offset of this tile

        # Hoisted, int32 (no per-chunk f32 iota re-materialization).
        class_ids = lax.broadcasted_iota(jnp.int32, (C, chunk), 0)
        lane_ids = lax.broadcasted_iota(jnp.int32, (1, chunk), 1)

        def chunk_body(s, carry):
            acc_xt, acc_x, acc_t, acc_uu, acc_u, acc_g = carry
            off = pl.multiple_of(s * chunk, chunk)

            x = x_ref[:, pl.ds(off, chunk)].astype(jnp.float32)    # (C, chunk)
            t = t_ref[:, pl.ds(off, chunk)]                         # (1, chunk) i32
            u = u_ref[:, pl.ds(off, chunk)].astype(jnp.float32)     # (1, chunk)

            # In-kernel tail mask (replaces wrapper-side jnp.pad).  Out-of-range
            # lanes may hold unspecified data -> use NaN-safe selects.
            valid = lane_ids < (HW - base - off)                     # (1, chunk)

            xm = jnp.where(valid, x, 0.0)
            um = jnp.where(valid, u, 0.0)
            onehot = jnp.where(jnp.logical_and(class_ids == t, valid), 1.0, 0.0)

            # First-index argmax over the class axis (torch.argmax tie-break).
            xmax = jnp.max(x, axis=0, keepdims=True)
            cand = jnp.where(x == xmax, class_ids, C)
            predict = jnp.min(cand, axis=0, keepdims=True)           # (1, chunk) i32
            ungt = jnp.where(jnp.logical_and(predict != t, valid), 1.0, 0.0)

            acc_xt = acc_xt + _lane_fold(xm * onehot)
            acc_x = acc_x + _lane_fold(xm)
            acc_t = acc_t + _lane_fold(onehot)
            acc_uu = acc_uu + _lane_fold(um * ungt)
            acc_u = acc_u + _lane_fold(um)
            acc_g = acc_g + _lane_fold(ungt)
            return acc_xt, acc_x, acc_t, acc_uu, acc_u, acc_g

        zc = jnp.zeros((C, 128), jnp.float32)
        z1 = jnp.zeros((1, 128), jnp.float32)
        acc_xt, acc_x, acc_t, acc_uu, acc_u, acc_g = lax.fori_loop(
            0, nchunk, chunk_body, (zc, zc, zc, z1, z1, z1), unroll=unroll)

        @pl.when(j == 0)
        def _init():
            out_ref[...] = jnp.zeros_like(out_ref)

        # Single accumulation into the resident output block per grid step.
        # NOTE: the three single-row un-stat stores are masked partial stores,
        # but they happen once per (>=64K-lane) grid step -- noise level.
        out_ref[0:C, :] += acc_xt
        out_ref[G:G + C, :] += acc_x
        out_ref[2 * G:2 * G + C, :] += acc_t
        out_ref[3 * G:3 * G + 1, :] += acc_uu
        out_ref[3 * G + 1:3 * G + 2, :] += acc_u
        out_ref[3 * G + 2:3 * G + 3, :] += acc_g

    return kernel


def dice_loss_un(logits, target, un, *, max_tile_hw=131072, chunk_hw=2048):
    """logits: (B, C, H, W); target: (B, H, W) int; un: (B, K, H, W).

    Returns shape-(1,) f32 tensor (matching the torch.Tensor([0]) accumulator)."""
    B, C, H, W = logits.shape
    if C < 2:
        raise ValueError("class_num (C) must be >= 2")
    Bu, K, Hu, Wu = un.shape
    HW = H * W

    G = _round_up(C, 8)                  # sublane-aligned row-group stride
    ROWS = 3 * G + 8                     # [x*onehot | x | onehot | un-stats + pad]

    # Free reshapes / casts only; no pad, no f32 label convert, no Un slice copy.
    x = logits.reshape(B, C, HW)                         # keep dtype (f32 or bf16)
    t = target.reshape(B, 1, HW).astype(jnp.int32)
    u = un.reshape(B, 1, K * HW)                         # channel 0 = first HW lanes

    x_bytes = jnp.dtype(x.dtype).itemsize
    u_bytes = jnp.dtype(u.dtype).itemsize
    vmem_limit, in_budget = _vmem_limits()

    # Big lane-dense DMA tile (multiple of the inner compute chunk), capped by
    # the generation-aware VMEM budget for double-buffered inputs.
    hw128 = _round_up(HW, 128)
    if hw128 <= chunk_hw:
        chunk = hw128
        tile = hw128
    else:
        chunk = chunk_hw
        per_lane = 2 * (C * x_bytes + 4 + u_bytes)       # double-buffered bytes/lane
        cap = max(chunk, (in_budget // per_lane) // chunk * chunk)
        need = _round_up(hw128, chunk)
        tile = max(chunk, (min(max_tile_hw, cap, need) // chunk) * chunk)

    nt = _cdiv(HW, tile)                                 # spatial tiles (no padding)
    nc = 2 if nt >= 2 else 1                             # split tiles over both TCs
    nt_core = _cdiv(nt, nc)
    nchunk = tile // chunk
    unroll = True if nchunk <= 4 else 2

    kernel = _make_dice_partial_kernel(C=C, G=G, HW=HW, tile=tile, chunk=chunk,
                                       nt_core=nt_core, unroll=unroll)

    def in_map(c, b, j):
        # Clamp so the extra step of core 1 (odd nt) stays in-bounds; its
        # contribution is fully masked in-kernel (base >= HW).
        return (b, 0, jnp.minimum(c * nt_core + j, nt - 1))

    partial = pl.pallas_call(
        kernel,
        out_shape=jax.ShapeDtypeStruct((nc, B, ROWS, 128), jnp.float32),
        grid_spec=pltpu.PrefetchScalarGridSpec(
            num_scalar_prefetch=0,
            grid=(nc, B, nt_core),
            in_specs=[
                pl.BlockSpec((None, C, tile), in_map),
                pl.BlockSpec((None, 1, tile), in_map),
                pl.BlockSpec((None, 1, tile), in_map),
            ],
            out_specs=pl.BlockSpec((None, None, ROWS, 128),
                                   lambda c, b, j: (c, b, 0, 0)),
        ),
        compiler_params=pltpu.CompilerParams(
            dimension_semantics=("parallel", "parallel", "arbitrary"),
            vmem_limit_bytes=vmem_limit),
    )(x, t, u)

    # Tiny finalize in plain JAX: lane/core/batch reduce + dice arithmetic.
    sums = jnp.sum(partial, axis=(0, 1, 3))              # (ROWS,)
    xt_s = sums[1:C]                                     # classes 1..C-1
    x_s = sums[G + 1:G + C]
    t_s = sums[2 * G + 1:2 * G + C]
    inter_un = sums[3 * G]
    u_sum = sums[3 * G + 1]
    ungt_sum = sums[3 * G + 2]

    # dice_un = SoftDiceLoss(Un, Un_GT) with smooth forced to 0.0
    # (0/0 -> NaN if Un and Un_GT are both all-zero, same as the PyTorch module).
    dice_un_loss = 1.0 - (2.0 * inter_un) / (u_sum + ungt_sum)
    # per-class dice; "if target_i.sum() == 0: dice = 1"
    dice_i = jnp.where(t_s == 0.0, 1.0, (2.0 * xt_s) / (x_s + t_s))
    dice_loss = 1.0 - jnp.sum(dice_i) / jnp.float32(C - 1)
    return jnp.reshape(dice_loss + dice_un_loss, (1,)).astype(jnp.float32)


def _reference_dice_loss_un(logits, target, un, class_num):
    """Pure-JAX reference of the PyTorch forward (for verification)."""
    predict = jnp.argmax(logits, axis=1)
    un_gt = (predict != target).astype(jnp.float32)
    un0 = un[:, 0].astype(jnp.float32)
    inter = jnp.sum(un0 * un_gt)
    unionset = jnp.sum(un0) + jnp.sum(un_gt)
    dice_un_loss = 1.0 - (2.0 * inter) / unionset

    dice_acc = jnp.float32(0.0)
    for i in range(1, class_num):
        xi = logits[:, i].astype(jnp.float32)
        ti = (target == i).astype(jnp.float32)
        intersect = jnp.sum(xi * ti)
        union = jnp.sum(xi) + jnp.sum(ti)
        dice_i = jnp.where(jnp.sum(ti) == 0.0, 1.0, (2.0 * intersect) / union)
        dice_acc = dice_acc + dice_i
    dice_loss = 1.0 - dice_acc / (class_num - 1)
    return jnp.reshape(dice_loss + dice_un_loss, (1,))


if __name__ == "__main__":
    B, C, H, W = 2, 4, 16, 16  # class_num = C = 4
    key = jax.random.PRNGKey(0)
    k1, k2, k3 = jax.random.split(key, 3)

    logits = jax.random.normal(k1, (B, C, H, W), dtype=jnp.float32)
    target = jax.random.randint(k2, (B, H, W), 0, C, dtype=jnp.int32)
    un = jax.random.uniform(k3, (B, 1, H, W), dtype=jnp.float32)

    out = dice_loss_un(logits, target, un)
    out = jax.block_until_ready(out)

    ref = _reference_dice_loss_un(logits, target, un, C)
    assert out.shape == (1,) and out.dtype == jnp.float32
    assert jnp.allclose(out, ref, rtol=1e-4, atol=1e-5), (out, ref)

    print("KERNEL_OK")
</pallas_src>

<mosaic_0001>
module attributes {stable_mosaic.version = 11 : i64} {
  func.func @kernel(%arg0: i32, %arg1: i32, %arg2: i32, %arg3: memref<1x4x256xf32, #tpu.memory_space<vmem>>, %arg4: memref<1x1x256xi32, #tpu.memory_space<vmem>>, %arg5: memref<1x1x256xf32, #tpu.memory_space<vmem>>, %arg6: memref<1x1x32x128xf32, #tpu.memory_space<vmem>>) attributes {dimension_semantics = [#tpu.dimension_semantics<parallel>, #tpu.dimension_semantics<parallel>, #tpu.dimension_semantics<arbitrary>], iteration_bounds = array<i64: 1, 2, 1>, scalar_prefetch = 0 : i64, scratch_operands = 0 : i64, tpu.core_type = #tpu.core_type<tc>, window_params = [{transform_indices = @transform_0, window_bounds = array<i64: 1, 4, 256>}, {transform_indices = @transform_1, window_bounds = array<i64: 1, 1, 256>}, {transform_indices = @transform_2, window_bounds = array<i64: 1, 1, 256>}, {transform_indices = @transform_3, window_bounds = array<i64: 1, 1, 32, 128>}]} {
    %c1_i32 = arith.constant 1 : i32
    %0 = arith.muli %arg0, %c1_i32 : i32
    %1 = arith.addi %0, %arg2 : i32
    %c256_i32 = arith.constant 256 : i32
    %2 = arith.muli %1, %c256_i32 : i32
    %3 = tpu.iota {dimensions = array<i32: 0>} : vector<4x256xi32>
    %4 = tpu.iota {dimensions = array<i32: 1>} : vector<1x256xi32>
    %cst = arith.constant 0.000000e+00 : f32
    %5 = vector.broadcast %cst : f32 to vector<4x128xf32>
    %cst_0 = arith.constant 0.000000e+00 : f32
    %6 = vector.broadcast %cst_0 : f32 to vector<1x128xf32>
    %c0_i32 = arith.constant 0 : i32
    %c256_i32_1 = arith.constant 256 : i32
    %7 = arith.muli %c0_i32, %c256_i32_1 : i32
    %8 = tpu.assume_multiple %7, 256 : i32
    %c0 = arith.constant 0 : index
    %c0_2 = arith.constant 0 : index
    %9 = arith.index_cast %8 : i32 to index
    %10 = vector.load %arg3[%c0, %c0_2, %9] : memref<1x4x256xf32, #tpu.memory_space<vmem>>, vector<1x4x256xf32>
    %11 = vector.shape_cast %10 : vector<1x4x256xf32> to vector<4x256xf32>
    %c0_3 = arith.constant 0 : index
    %c0_4 = arith.constant 0 : index
    %12 = arith.index_cast %8 : i32 to index
    %13 = vector.load %arg4[%c0_3, %c0_4, %12] : memref<1x1x256xi32, #tpu.memory_space<vmem>>, vector<1x1x256xi32>
    %14 = vector.shape_cast %13 : vector<1x1x256xi32> to vector<1x256xi32>
    %c0_5 = arith.constant 0 : index
    %c0_6 = arith.constant 0 : index
    %15 = arith.index_cast %8 : i32 to index
    %16 = vector.load %arg5[%c0_5, %c0_6, %15] : memref<1x1x256xf32, #tpu.memory_space<vmem>>, vector<1x1x256xf32>
    %17 = vector.shape_cast %16 : vector<1x1x256xf32> to vector<1x256xf32>
    %c256_i32_7 = arith.constant 256 : i32
    %18 = arith.subi %c256_i32_7, %2 : i32
    %19 = arith.subi %18, %8 : i32
    %20 = vector.broadcast %19 : i32 to vector<1x256xi32>
    %21 = arith.cmpi slt, %4, %20 : vector<1x256xi32>
    %cst_8 = arith.constant 0.000000e+00 : f32
    %22 = vector.shape_cast %21 : vector<1x256xi1> to vector<1x256xi1>
    %23 = vector.broadcast %22 : vector<1x256xi1> to vector<4x256xi1>
    %24 = vector.broadcast %cst_8 : f32 to vector<4x256xf32>
    %25 = arith.select %23, %11, %24 : vector<4x256xi1>, vector<4x256xf32>
    %cst_9 = arith.constant 0.000000e+00 : f32
    %26 = vector.broadcast %cst_9 : f32 to vector<1x256xf32>
    %27 = arith.select %21, %17, %26 : vector<1x256xi1>, vector<1x256xf32>
    %28 = vector.broadcast %14 : vector<1x256xi32> to vector<4x256xi32>
    %29 = arith.cmpi eq, %3, %28 : vector<4x256xi32>
    %30 = vector.broadcast %21 : vector<1x256xi1> to vector<4x256xi1>
    %31 = arith.andi %29, %30 : vector<4x256xi1>
    %cst_10 = arith.constant 1.000000e+00 : f32
    %cst_11 = arith.constant 0.000000e+00 : f32
    %32 = vector.broadcast %cst_10 : f32 to vector<4x256xf32>
    %33 = vector.broadcast %cst_11 : f32 to vector<4x256xf32>
    %34 = arith.select %31, %32, %33 : vector<4x256xi1>, vector<4x256xf32>
    %cst_12 = arith.constant dense<0xFF800000> : vector<256xf32>
    %35 = vector.multi_reduction <maximumf>, %11, %cst_12 [0] : vector<4x256xf32> to vector<256xf32>
    %36 = vector.shape_cast %35 : vector<256xf32> to vector<1x256xf32>
    %37 = vector.broadcast %36 : vector<1x256xf32> to vector<4x256xf32>
    %38 = arith.cmpf oeq, %11, %37 : vector<4x256xf32>
    %c4_i32 = arith.constant 4 : i32
    %39 = vector.broadcast %c4_i32 : i32 to vector<4x256xi32>
    %40 = arith.select %38, %3, %39 : vector<4x256xi1>, vector<4x256xi32>
    %cst_13 = arith.constant dense<2147483647> : vector<256xi32>
    %41 = vector.multi_reduction <minsi>, %40, %cst_13 [0] : vector<4x256xi32> to vector<256xi32>
    %42 = vector.shape_cast %41 : vector<256xi32> to vector<1x256xi32>
    %43 = arith.cmpi ne, %42, %14 : vector<1x256xi32>
    %44 = arith.andi %43, %21 : vector<1x256xi1>
    %cst_14 = arith.constant 1.000000e+00 : f32
    %cst_15 = arith.constant 0.000000e+00 : f32
    %45 = vector.broadcast %cst_14 : f32 to vector<1x256xf32>
    %46 = vector.broadcast %cst_15 : f32 to vector<1x256xf32>
    %47 = arith.select %44, %45, %46 : vector<1x256xi1>, vector<1x256xf32>
    %48 = arith.mulf %25, %34 : vector<4x256xf32>
    %49 = vector.extract_strided_slice %48 {offsets = [0, 0], sizes = [4, 128], strides = [1, 1]} : vector<4x256xf32> to vector<4x128xf32>
    %50 = vector.extract_strided_slice %48 {offsets = [0, 128], sizes = [4, 128], strides = [1, 1]} : vector<4x256xf32> to vector<4x128xf32>
    %51 = arith.addf %49, %50 : vector<4x128xf32>
    %52 = arith.addf %5, %51 : vector<4x128xf32>
    %53 = vector.extract_strided_slice %25 {offsets = [0, 0], sizes = [4, 128], strides = [1, 1]} : vector<4x256xf32> to vector<4x128xf32>
    %54 = vector.extract_strided_slice %25 {offsets = [0, 128], sizes = [4, 128], strides = [1, 1]} : vector<4x256xf32> to vector<4x128xf32>
    %55 = arith.addf %53, %54 : vector<4x128xf32>
    %56 = arith.addf %5, %55 : vector<4x128xf32>
    %57 = vector.extract_strided_slice %34 {offsets = [0, 0], sizes = [4, 128], strides = [1, 1]} : vector<4x256xf32> to vector<4x128xf32>
    %58 = vector.extract_strided_slice %34 {offsets = [0, 128], sizes = [4, 128], strides = [1, 1]} : vector<4x256xf32> to vector<4x128xf32>
    %59 = arith.addf %57, %58 : vector<4x128xf32>
    %60 = arith.addf %5, %59 : vector<4x128xf32>
    %61 = arith.mulf %27, %47 : vector<1x256xf32>
    %62 = vector.extract_strided_slice %61 {offsets = [0, 0], sizes = [1, 128], strides = [1, 1]} : vector<1x256xf32> to vector<1x128xf32>
    %63 = vector.extract_strided_slice %61 {offsets = [0, 128], sizes = [1, 128], strides = [1, 1]} : vector<1x256xf32> to vector<1x128xf32>
    %64 = arith.addf %62, %63 : vector<1x128xf32>
    %65 = arith.addf %6, %64 : vector<1x128xf32>
    %66 = vector.extract_strided_slice %27 {offsets = [0, 0], sizes = [1, 128], strides = [1, 1]} : vector<1x256xf32> to vector<1x128xf32>
    %67 = vector.extract_strided_slice %27 {offsets = [0, 128], sizes = [1, 128], strides = [1, 1]} : vector<1x256xf32> to vector<1x128xf32>
    %68 = arith.addf %66, %67 : vector<1x128xf32>
    %69 = arith.addf %6, %68 : vector<1x128xf32>
    %70 = vector.extract_strided_slice %47 {offsets = [0, 0], sizes = [1, 128], strides = [1, 1]} : vector<1x256xf32> to vector<1x128xf32>
    %71 = vector.extract_strided_slice %47 {offsets = [0, 128], sizes = [1, 128], strides = [1, 1]} : vector<1x256xf32> to vector<1x128xf32>
    %72 = arith.addf %70, %71 : vector<1x128xf32>
    %73 = arith.addf %6, %72 : vector<1x128xf32>
    %c1_i32_16 = arith.constant 1 : i32
    %c0_i32_17 = arith.constant 0 : i32
    %74 = arith.cmpi eq, %arg2, %c0_i32_17 : i32
    %75 = arith.extui %74 : i1 to i32
    %c0_i32_18 = arith.constant 0 : i32
    %76 = arith.cmpi ne, %75, %c0_i32_18 : i32
    scf.if %76 {
      %cst_62 = arith.constant 0.000000e+00 : f32
      %113 = vector.broadcast %cst_62 : f32 to vector<32x128xf32>
      %c0_63 = arith.constant 0 : index
      %c0_64 = arith.constant 0 : index
      %c0_65 = arith.constant 0 : index
      %c0_66 = arith.constant 0 : index
      %114 = vector.load %arg6[%c0_63, %c0_64, %c0_65, %c0_66] : memref<1x1x32x128xf32, #tpu.memory_space<vmem>>, vector<1x1x32x128xf32>
      %115 = vector.shape_cast %114 : vector<1x1x32x128xf32> to vector<32x128xf32>
      %116 = vector.shape_cast %113 : vector<32x128xf32> to vector<1x1x32x128xf32>
      tpu.vector_store %arg6[%c0_63, %c0_64, %c0_65, %c0_66], %116 {strides = array<i32>} : memref<1x1x32x128xf32, #tpu.memory_space<vmem>>, vector<1x1x32x128xf32>,
    } else {
    }
    %c0_19 = arith.constant 0 : index
    %c0_20 = arith.constant 0 : index
    %c0_21 = arith.constant 0 : index
    %c0_22 = arith.constant 0 : index
    %77 = vector.load %arg6[%c0_19, %c0_20, %c0_21, %c0_22] : memref<1x1x32x128xf32, #tpu.memory_space<vmem>>, vector<1x1x4x128xf32>
    %78 = vector.shape_cast %77 : vector<1x1x4x128xf32> to vector<4x128xf32>
    %79 = arith.addf %78, %52 : vector<4x128xf32>
    %c0_23 = arith.constant 0 : index
    %c0_24 = arith.constant 0 : index
    %c0_25 = arith.constant 0 : index
    %c0_26 = arith.constant 0 : index
    %80 = vector.load %arg6[%c0_23, %c0_24, %c0_25, %c0_26] : memref<1x1x32x128xf32, #tpu.memory_space<vmem>>, vector<1x1x4x128xf32>
    %81 = vector.shape_cast %80 : vector<1x1x4x128xf32> to vector<4x128xf32>
    %82 = vector.shape_cast %79 : vector<4x128xf32> to vector<1x1x4x128xf32>
    tpu.vector_store %arg6[%c0_23, %c0_24, %c0_25, %c0_26], %82 {strides = array<i32>} : memref<1x1x32x128xf32, #tpu.memory_space<vmem>>, vector<1x1x4x128xf32>,
    %c0_27 = arith.constant 0 : index
    %c0_28 = arith.constant 0 : index
    %c8 = arith.constant 8 : index
    %c0_29 = arith.constant 0 : index
    %83 = vector.load %arg6[%c0_27, %c0_28, %c8, %c0_29] : memref<1x1x32x128xf32, #tpu.memory_space<vmem>>, vector<1x1x4x128xf32>
    %84 = vector.shape_cast %83 : vector<1x1x4x128xf32> to vector<4x128xf32>
    %85 = arith.addf %84, %56 : vector<4x128xf32>
    %c0_30 = arith.constant 0 : index
    %c0_31 = arith.constant 0 : index
    %c8_32 = arith.constant 8 : index
    %c0_33 = arith.constant 0 : index
    %86 = vector.load %arg6[%c0_30, %c0_31, %c8_32, %c0_33] : memref<1x1x32x128xf32, #tpu.memory_space<vmem>>, vector<1x1x4x128xf32>
    %87 = vector.shape_cast %86 : vector<1x1x4x128xf32> to vector<4x128xf32>
    %88 = vector.shape_cast %85 : vector<4x128xf32> to vector<1x1x4x128xf32>
    tpu.vector_store %arg6[%c0_30, %c0_31, %c8_32, %c0_33], %88 {strides = array<i32>} : memref<1x1x32x128xf32, #tpu.memory_space<vmem>>, vector<1x1x4x128xf32>,
    %c0_34 = arith.constant 0 : index
    %c0_35 = arith.constant 0 : index
    %c16 = arith.constant 16 : index
    %c0_36 = arith.constant 0 : index
    %89 = vector.load %arg6[%c0_34, %c0_35, %c16, %c0_36] : memref<1x1x32x128xf32, #tpu.memory_space<vmem>>, vector<1x1x4x128xf32>
    %90 = vector.shape_cast %89 : vector<1x1x4x128xf32> to vector<4x128xf32>
    %91 = arith.addf %90, %60 : vector<4x128xf32>
    %c0_37 = arith.constant 0 : index
    %c0_38 = arith.constant 0 : index
    %c16_39 = arith.constant 16 : index
    %c0_40 = arith.constant 0 : index
    %92 = vector.load %arg6[%c0_37, %c0_38, %c16_39, %c0_40] : memref<1x1x32x128xf32, #tpu.memory_space<vmem>>, vector<1x1x4x128xf32>
    %93 = vector.shape_cast %92 : vector<1x1x4x128xf32> to vector<4x128xf32>
    %94 = vector.shape_cast %91 : vector<4x128xf32> to vector<1x1x4x128xf32>
    tpu.vector_store %arg6[%c0_37, %c0_38, %c16_39, %c0_40], %94 {strides = array<i32>} : memref<1x1x32x128xf32, #tpu.memory_space<vmem>>, vector<1x1x4x128xf32>,
    %c0_41 = arith.constant 0 : index
    %c0_42 = arith.constant 0 : index
    %c24 = arith.constant 24 : index
    %c0_43 = arith.constant 0 : index
    %95 = vector.load %arg6[%c0_41, %c0_42, %c24, %c0_43] : memref<1x1x32x128xf32, #tpu.memory_space<vmem>>, vector<1x1x1x128xf32>
    %96 = vector.shape_cast %95 : vector<1x1x1x128xf32> to vector<1x128xf32>
    %97 = arith.addf %96, %65 : vector<1x128xf32>
    %c0_44 = arith.constant 0 : index
    %c0_45 = arith.constant 0 : index
    %c24_46 = arith.constant 24 : index
    %c0_47 = arith.constant 0 : index
    %98 = vector.load %arg6[%c0_44, %c0_45, %c24_46, %c0_47] : memref<1x1x32x128xf32, #tpu.memory_space<vmem>>, vector<1x1x1x128xf32>
    %99 = vector.shape_cast %98 : vector<1x1x1x128xf32> to vector<1x128xf32>
    %100 = vector.shape_cast %97 : vector<1x128xf32> to vector<1x1x1x128xf32>
    tpu.vector_store %arg6[%c0_44, %c0_45, %c24_46, %c0_47], %100 {strides = array<i32>} : memref<1x1x32x128xf32, #tpu.memory_space<vmem>>, vector<1x1x1x128xf32>,
    %c0_48 = arith.constant 0 : index
    %c0_49 = arith.constant 0 : index
    %c25 = arith.constant 25 : index
    %c0_50 = arith.constant 0 : index
    %101 = vector.load %arg6[%c0_48, %c0_49, %c25, %c0_50] : memref<1x1x32x128xf32, #tpu.memory_space<vmem>>, vector<1x1x1x128xf32>
    %102 = vector.shape_cast %101 : vector<1x1x1x128xf32> to vector<1x128xf32>
    %103 = arith.addf %102, %69 : vector<1x128xf32>
    %c0_51 = arith.constant 0 : index
    %c0_52 = arith.constant 0 : index
    %c25_53 = arith.constant 25 : index
    %c0_54 = arith.constant 0 : index
    %104 = vector.load %arg6[%c0_51, %c0_52, %c25_53, %c0_54] : memref<1x1x32x128xf32, #tpu.memory_space<vmem>>, vector<1x1x1x128xf32>
    %105 = vector.shape_cast %104 : vector<1x1x1x128xf32> to vector<1x128xf32>
    %106 = vector.shape_cast %103 : vector<1x128xf32> to vector<1x1x1x128xf32>
    tpu.vector_store %arg6[%c0_51, %c0_52, %c25_53, %c0_54], %106 {strides = array<i32>} : memref<1x1x32x128xf32, #tpu.memory_space<vmem>>, vector<1x1x1x128xf32>,
    %c0_55 = arith.constant 0 : index
    %c0_56 = arith.constant 0 : index
    %c26 = arith.constant 26 : index
    %c0_57 = arith.constant 0 : index
    %107 = vector.load %arg6[%c0_55, %c0_56, %c26, %c0_57] : memref<1x1x32x128xf32, #tpu.memory_space<vmem>>, vector<1x1x1x128xf32>
    %108 = vector.shape_cast %107 : vector<1x1x1x128xf32> to vector<1x128xf32>
    %109 = arith.addf %108, %73 : vector<1x128xf32>
    %c0_58 = arith.constant 0 : index
    %c0_59 = arith.constant 0 : index
    %c26_60 = arith.constant 26 : index
    %c0_61 = arith.constant 0 : index
    %110 = vector.load %arg6[%c0_58, %c0_59, %c26_60, %c0_61] : memref<1x1x32x128xf32, #tpu.memory_space<vmem>>, vector<1x1x1x128xf32>
    %111 = vector.shape_cast %110 : vector<1x1x1x128xf32> to vector<1x128xf32>
    %112 = vector.shape_cast %109 : vector<1x128xf32> to vector<1x1x1x128xf32>
    tpu.vector_store %arg6[%c0_58, %c0_59, %c26_60, %c0_61], %112 {strides = array<i32>} : memref<1x1x32x128xf32, #tpu.memory_space<vmem>>, vector<1x1x1x128xf32>,
    return
  }
  func.func @transform_0(%arg0: i32, %arg1: i32, %arg2: i32) -> (i32, i32, i32) {
    %c1_i32 = arith.constant 1 : i32
    %0 = arith.muli %arg0, %c1_i32 : i32
    %1 = arith.addi %0, %arg2 : i32
    %c0_i32 = arith.constant 0 : i32
    %2 = arith.minsi %1, %c0_i32 : i32
    %c0_i32_0 = arith.constant 0 : i32
    %c0_i32_1 = arith.constant 0 : i32
    return %arg1, %c0_i32_0, %2 : i32, i32, i32
  }
  func.func @transform_1(%arg0: i32, %arg1: i32, %arg2: i32) -> (i32, i32, i32) {
    %c1_i32 = arith.constant 1 : i32
    %0 = arith.muli %arg0, %c1_i32 : i32
    %1 = arith.addi %0, %arg2 : i32
    %c0_i32 = arith.constant 0 : i32
    %2 = arith.minsi %1, %c0_i32 : i32
    %c0_i32_0 = arith.constant 0 : i32
    %c0_i32_1 = arith.constant 0 : i32
    return %arg1, %c0_i32_0, %2 : i32, i32, i32
  }
  func.func @transform_2(%arg0: i32, %arg1: i32, %arg2: i32) -> (i32, i32, i32) {
    %c1_i32 = arith.constant 1 : i32
    %0 = arith.muli %arg0, %c1_i32 : i32
    %1 = arith.addi %0, %arg2 : i32
    %c0_i32 = arith.constant 0 : i32
    %2 = arith.minsi %1, %c0_i32 : i32
    %c0_i32_0 = arith.constant 0 : i32
    %c0_i32_1 = arith.constant 0 : i32
    return %arg1, %c0_i32_0, %2 : i32, i32, i32
  }
  func.func @transform_3(%arg0: i32, %arg1: i32, %arg2: i32) -> (i32, i32, i32, i32) {
    %c0_i32 = arith.constant 0 : i32
    %c0_i32_0 = arith.constant 0 : i32
    %c0_i32_1 = arith.constant 0 : i32
    return %arg0, %arg1, %c0_i32, %c0_i32_0 : i32, i32, i32, i32
  }
}

</mosaic_0001>

<llo_original>
// kernel: tpu_custom_call.1
$region0: #{tpu_custom_call.1}
  #allocation0 [shape = 'u32[]', space=smem, size = 0x4, offset = 0x4, fixed_abs, tag = 'smem constant byte address 0x4 - core index']
  #allocation1 [shape = 'u32[72,128]{1,0:T(1,128)}', space=vmem, size = 0x9000, scoped, tag = 'internal scratch']
  %s0 = inlined_call_operand.hbm [shape: f32[2,4,256], index: 0, kind: input, shape index: {}]
  %s1 = inlined_call_operand.hbm [shape: s32[2,1,256], index: 1, kind: input, shape index: {}]
  %s2 = inlined_call_operand.hbm [shape: f32[2,1,256], index: 2, kind: input, shape index: {}]
  %s3 = inlined_call_operand.hbm [shape: f32[1,2,32,128], index: 3, kind: output, shape index: {}]
  %s4 = sld [smem:[#allocation0]]
  $region61: #{tpu_custom_call.1} parent=0
    _
  %s6 = ssub.s32 1, %s4
  %s7 = scalar_select 0, %s6, %s4
  $region1: #{tpu_custom_call.1} parent=0
    #allocation2 [shape = 'u8[8192]{0}', space=vmem, size = 0x2000, scoped, tag = 'input window, operand 0']
    #allocation3 [shape = 's32[2]{0}', space=sflag, size = 0x8, scoped, tag = 'scoped memory for tpu_custom_call.1']
    #allocation4 [shape = 's32[2]{0}', space=sflag, size = 0x8, scoped, tag = 'scoped memory for tpu_custom_call.1']
    #allocation5 [shape = 'u8[2048]{0}', space=vmem, size = 0x800, scoped, tag = 'input window, operand 1']
    #allocation6 [shape = 's32[2]{0}', space=sflag, size = 0x8, scoped, tag = 'scoped memory for tpu_custom_call.1']
    #allocation7 [shape = 'u8[2048]{0}', space=vmem, size = 0x800, scoped, tag = 'input window, operand 2']
    #allocation8 [shape = 'u8[32768]{0}', space=vmem, size = 0x8000, scoped, tag = 'output window, operand 0']
    %8 = vsyncpa [#allocation3], 0
    %s9 = scalar_lea.sflag [#allocation3], 1
    %10 = vsyncpa %s9, 0
    %11 = vsyncpa [#allocation6], 0
    %s12 = scalar_lea.sflag [#allocation6], 1
    %13 = vsyncpa %s12, 0
    %14 = vsyncpa [#allocation4], 0
    %s15 = scalar_lea.sflag [#allocation4], 1
    %16 = vsyncpa %s15, 0
    loop: start=0, step=1, limit=4
    $region2: #{tpu_custom_call.1} parent=1 // loop_pre_header
      _
    $region3: #{tpu_custom_call.1} parent=1 // loop_header
      %s18 = sphi 0, %s22
      %p19 = scmp.ge.s32.totalorder %s18, 4
      %s25 = sphi 0, %s44
      %s26 = sphi 0, %s40
      %s27 = sphi 0, %s36
      %s28 = sphi 0, %s25
      %s29 = sphi 0, %s26
      %s30 = sphi 0, %s27
      %s31 = sphi 0, %s28
      %s32 = sphi 0, %s29
      %s33 = sphi 0, %s30
      %s55 = sphi 0, %s57
      %s58 = sphi 0, %s55
      %s59 = sphi 0, %s58
      %s75 = sphi 0, %s59
      %s89 = sphi 0, %s91
      %s92 = sphi 0, %s89
      %s93 = sphi 0, %s92
      %s109 = sphi 0, %s93
      %s123 = sphi 0, %s125
      %s126 = sphi 0, %s123
      %s127 = sphi 0, %s126
      %s143 = sphi 0, %s127
      %s151 = sphi 0, %s153
      %s154 = sphi 0, %s151
      %s155 = sphi 0, %s154
      %s171 = sphi 0, %s155
    $region4: #{tpu_custom_call.1} parent=1 // loop_header_branch
      %21 = sbr.rel (%p19) target = $region8
    $region5: #{tpu_custom_call.1} parent=1 // loop_body
      %s23 = ssub.s32 %s18, 1
      %s24 = ssub.s32 %s18, 2
      %s34 = sadd.s32 1, %s27
      %p35 = scmp.ge.s32.totalorder %s34, 1
      %s36 = scalar_select %p35, 0, %s34
      %s37 = sadd.s32 1, %s26
      %s38 = scalar_select %p35, %s37, %s26
      %p39 = scmp.ge.s32.totalorder %s38, 2
      %s40 = scalar_select %p39, 0, %s38
      %s41 = sadd.s32 1, %s25
      %s42 = scalar_select %p39, %s41, %s25
      %p43 = scmp.ge.s32.totalorder %s42, 1
      %s44 = scalar_select %p43, 0, %s42
      %s45 = sadd.s32 %s25, %s27
      %p46 = scmp.lt.s32.totalorder %s45, 0
      %s47 = scalar_select %p46, %s45, 0
      %s48 = sadd.s32 %s44, %s36
      %p49 = scmp.lt.s32.totalorder %s48, 0
      %s50 = scalar_select %p49, %s48, 0
      %s51 = ssub.s32 %s26, %s40
      %s52 = ssub.s32 %s47, %s50
      %s53 = sor.u32 %s51, %s52
      %p54 = scmp.eq.s32.totalorder %s53, 0
      %s56 = sadd.s32 %s55, 1
      %s57 = scalar_select %p54, %s55, %s56
      %p60 = pneg %p54
      %p61 = scmp.eq.s32.totalorder %s18, 1
      %p62 = por %p60, %p61
      %p63 = scmp.ne.s32.totalorder %s55, %s58
      %p64 = scmp.eq.s32.totalorder %s18, 0
      %p65 = por %p63, %p64
      %p66 = scmp.ne.s32.totalorder %s55, %s58
      %p67 = scmp.eq.s32.totalorder %s23, 1
      %p68 = por %p66, %p67
      %p69 = scmp.ne.s32.totalorder %s58, %s59
      %p70 = scmp.eq.s32.totalorder %s23, 0
      %p71 = por %p69, %p70
      %p72 = scmp.ne.s32.totalorder %s58, %s59
      %p73 = scmp.eq.s32.totalorder %s24, 1
      %p74 = por %p72, %p73
      %p76 = scmp.ne.s32.totalorder %s59, %s75
      %p77 = scmp.eq.s32.totalorder %s24, 0
      %p78 = por %p76, %p77
      %s79 = sadd.s32 %s25, %s27
      %p80 = scmp.lt.s32.totalorder %s79, 0
      %s81 = scalar_select %p80, %s79, 0
      %s82 = sadd.s32 %s44, %s36
      %p83 = scmp.lt.s32.totalorder %s82, 0
      %s84 = scalar_select %p83, %s82, 0
      %s85 = ssub.s32 %s26, %s40
      %s86 = ssub.s32 %s81, %s84
      %s87 = sor.u32 %s85, %s86
      %p88 = scmp.eq.s32.totalorder %s87, 0
      %s90 = sadd.s32 %s89, 1
      %s91 = scalar_select %p88, %s89, %s90
      %p94 = pneg %p88
      %p95 = scmp.eq.s32.totalorder %s18, 1
      %p96 = por %p94, %p95
      %p97 = scmp.ne.s32.totalorder %s89, %s92
      %p98 = scmp.eq.s32.totalorder %s18, 0
      %p99 = por %p97, %p98
      %p100 = scmp.ne.s32.totalorder %s89, %s92
      %p101 = scmp.eq.s32.totalorder %s23, 1
      %p102 = por %p100, %p101
      %p103 = scmp.ne.s32.totalorder %s92, %s93
      %p104 = scmp.eq.s32.totalorder %s23, 0
      %p105 = por %p103, %p104
      %p106 = scmp.ne.s32.totalorder %s92, %s93
      %p107 = scmp.eq.s32.totalorder %s24, 1
      %p108 = por %p106, %p107
      %p110 = scmp.ne.s32.totalorder %s93, %s109
      %p111 = scmp.eq.s32.totalorder %s24, 0
      %p112 = por %p110, %p111
      %s113 = sadd.s32 %s25, %s27
      %p114 = scmp.lt.s32.totalorder %s113, 0
      %s115 = scalar_select %p114, %s113, 0
      %s116 = sadd.s32 %s44, %s36
      %p117 = scmp.lt.s32.totalorder %s116, 0
      %s118 = scalar_select %p117, %s116, 0
      %s119 = ssub.s32 %s26, %s40
      %s120 = ssub.s32 %s115, %s118
      %s121 = sor.u32 %s119, %s120
      %p122 = scmp.eq.s32.totalorder %s121, 0
      %s124 = sadd.s32 %s123, 1
      %s125 = scalar_select %p122, %s123, %s124
      %p128 = pneg %p122
      %p129 = scmp.eq.s32.totalorder %s18, 1
      %p130 = por %p128, %p129
      %p131 = scmp.ne.s32.totalorder %s123, %s126
      %p132 = scmp.eq.s32.totalorder %s18, 0
      %p133 = por %p131, %p132
      %p134 = scmp.ne.s32.totalorder %s123, %s126
      %p135 = scmp.eq.s32.totalorder %s23, 1
      %p136 = por %p134, %p135
      %p137 = scmp.ne.s32.totalorder %s126, %s127
      %p138 = scmp.eq.s32.totalorder %s23, 0
      %p139 = por %p137, %p138
      %p140 = scmp.ne.s32.totalorder %s126, %s127
      %p141 = scmp.eq.s32.totalorder %s24, 1
      %p142 = por %p140, %p141
      %p144 = scmp.ne.s32.totalorder %s127, %s143
      %p145 = scmp.eq.s32.totalorder %s24, 0
      %p146 = por %p144, %p145
      %s147 = ssub.s32 %s25, %s44
      %s148 = ssub.s32 %s26, %s40
      %s149 = sor.u32 %s147, %s148
      %p150 = scmp.eq.s32.totalorder %s149, 0
      %s152 = sadd.s32 %s151, 1
      %s153 = scalar_select %p150, %s151, %s152
      %p156 = pneg %p150
      %p157 = scmp.eq.s32.totalorder %s18, 1
      %p158 = por %p156, %p157
      %p159 = scmp.ne.s32.totalorder %s151, %s154
      %p160 = scmp.eq.s32.totalorder %s18, 0
      %p161 = por %p159, %p160
      %p162 = scmp.ne.s32.totalorder %s151, %s154
      %p163 = scmp.eq.s32.totalorder %s23, 1
      %p164 = por %p162, %p163
      %p165 = scmp.ne.s32.totalorder %s154, %s155
      %p166 = scmp.eq.s32.totalorder %s23, 0
      %p167 = por %p165, %p166
      %p168 = scmp.ne.s32.totalorder %s154, %s155
      %p169 = scmp.eq.s32.totalorder %s24, 1
      %p170 = por %p168, %p169
      %p172 = scmp.ne.s32.totalorder %s155, %s171
      %p173 = scmp.eq.s32.totalorder %s24, 0
      %p174 = por %p172, %p173
      %p175 = scmp.le.s32.totalorder 1, %s18
      %p176 = scmp.lt.s32.totalorder %s18, 3
      %p177 = pnand %p175, %p176
      %p178 = pneg %p177
      // Predicated region
      $region9: #{tpu_custom_call.1} parent=5 // pred_check
        _
      $region10: #{tpu_custom_call.1} parent=5 // pred_check_branch
        %180 = sbr.rel (%p177) target = $region12
      $region11: #{tpu_custom_call.1} parent=5 // pred_region
        %s181 = ssub.s32 %s18, 1
      $region12: #{tpu_custom_call.1} parent=5 // pred_fallthru
        _
      %p182 = scmp.lt.s32.totalorder %s18, 2
      // Predicated region
      $region13: #{tpu_custom_call.1} parent=5 // pred_check
        %p183 = pneg %p182
      $region14: #{tpu_custom_call.1} parent=5 // pred_check_branch
        %185 = sbr.rel (%p183) target = $region16
      $region15: #{tpu_custom_call.1} parent=5 // pred_region
        // Predicated region
        $region17: #{tpu_custom_call.1} parent=15 // pred_check
          %p186 = pneg %p65
        $region18: #{tpu_custom_call.1} parent=15 // pred_check_branch
          %188 = sbr.rel (%p186) target = $region20
        $region19: #{tpu_custom_call.1} parent=15 // pred_region
          %s189 = sand.u32 %s55, 1
          %s190 = scalar_lea.sflag [#allocation3], %s189
          %s191 = sand.u32 %s55, 1
          %s192 = smul.addr %s191, 8
          %s193 = scalar_lea.vmem [#allocation2], %s192
          %s194 = sadd.s32 %s25, %s27
          %p195 = scmp.lt.s32.totalorder %s194, 0
          %s196 = scalar_select %p195, %s194, 0
          %s197 = smul.u32 2, %s196
          %199 = vsyncadd %s190, 0
          %s200 = smul.addr %s26, 2
          %s201 = sadd.s32 %s197, %s200
          %s202 = smul.addr %s201, 4
          %s203 = scalar_lea.hbm %s0, %s202
          %s205 = sshll.u32 %s203, 4
          %s206 = int_to_ptr.hbm [resolvable:$true] %s205
          %s207 = sshll.u32 %s193, 4
          %s208 = int_to_ptr.vmem [resolvable:$true] %s207
          %210 = dma.hbm_to_vmem [thread:$0]  %s206, 128, %s208, %s190
        $region20: #{tpu_custom_call.1} parent=15 // pred_fallthru
          _
        // Predicated region
        $region21: #{tpu_custom_call.1} parent=15 // pred_check
          %p211 = pneg %p99
        $region22: #{tpu_custom_call.1} parent=15 // pred_check_branch
          %213 = sbr.rel (%p211) target = $region24
        $region23: #{tpu_custom_call.1} parent=15 // pred_region
          %s214 = sand.u32 %s18, 1
          %s215 = scalar_lea.sflag [#allocation6], %s214
          %s216 = sand.u32 %s89, 1
          %s217 = smul.addr %s216, 2
          %s218 = scalar_lea.vmem [#allocation5], %s217
          %s219 = sadd.s32 %s25, %s27
          %p220 = scmp.lt.s32.totalorder %s219, 0
          %s221 = scalar_select %p220, %s219, 0
          %s222 = smul.u32 2, %s221
          %224 = vsyncadd %s215, 0
          %s225 = smul.addr %s26, 2
          %s226 = sadd.s32 %s222, %s225
          %s227 = scalar_lea.hbm %s1, %s226
          %s229 = sshll.u32 %s227, 4
          %s230 = int_to_ptr.hbm [resolvable:$true] %s229
          %s231 = sshll.u32 %s218, 4
          %s232 = int_to_ptr.vmem [resolvable:$true] %s231
          %234 = dma.hbm_to_vmem [thread:$0]  %s230, 32, %s232, %s215
        $region24: #{tpu_custom_call.1} parent=15 // pred_fallthru
          _
        // Predicated region
        $region25: #{tpu_custom_call.1} parent=15 // pred_check
          %p235 = pneg %p133
        $region26: #{tpu_custom_call.1} parent=15 // pred_check_branch
          %237 = sbr.rel (%p235) target = $region28
        $region27: #{tpu_custom_call.1} parent=15 // pred_region
          %s238 = sand.u32 %s18, 1
          %s239 = scalar_lea.sflag [#allocation6], %s238
          %s240 = sand.u32 %s123, 1
          %s241 = smul.addr %s240, 2
          %s242 = scalar_lea.vmem [#allocation7], %s241
          %s243 = sadd.s32 %s25, %s27
          %p244 = scmp.lt.s32.totalorder %s243, 0
          %s245 = scalar_select %p244, %s243, 0
          %s246 = smul.u32 2, %s245
          %248 = vsyncadd %s239, 0
          %s249 = smul.addr %s26, 2
          %s250 = sadd.s32 %s246, %s249
          %s251 = scalar_lea.hbm %s2, %s250
          %s253 = sshll.u32 %s251, 4
          %s254 = int_to_ptr.hbm [resolvable:$true] %s253
          %s255 = sshll.u32 %s242, 4
          %s256 = int_to_ptr.vmem [resolvable:$true] %s255
          %258 = dma.hbm_to_vmem [thread:$0]  %s254, 32, %s256, %s239
        $region28: #{tpu_custom_call.1} parent=15 // pred_fallthru
          _
      $region16: #{tpu_custom_call.1} parent=5 // pred_fallthru
        _
      %p259 = scmp.le.s32.totalorder 1, %s18
      %p260 = scmp.lt.s32.totalorder %s18, 3
      %p261 = pnand %p259, %p260
      %p262 = pneg %p261
      // Predicated region
      $region29: #{tpu_custom_call.1} parent=5 // pred_check
        _
      $region30: #{tpu_custom_call.1} parent=5 // pred_check_branch
        %264 = sbr.rel (%p261) target = $region32
      $region31: #{tpu_custom_call.1} parent=5 // pred_region
        %s265 = ssub.s32 %s18, 1
        %s266 = sand.u32 %s58, 1
        %s267 = scalar_lea.sflag [#allocation3], %s266
        %s268 = sand.u32 %s58, 1
        %s269 = smul.addr %s268, 8
        %s270 = scalar_lea.vmem [#allocation2], %s269
        // Predicated region
        $region33: #{tpu_custom_call.1} parent=31 // pred_check
          %p271 = pneg %p71
        $region34: #{tpu_custom_call.1} parent=31 // pred_check_branch
          %273 = sbr.rel (%p271) target = $region36
        $region35: #{tpu_custom_call.1} parent=31 // pred_region
          %275 = dma.done %s267, 128
        $region36: #{tpu_custom_call.1} parent=31 // pred_fallthru
          _
        %s276 = sand.u32 %s23, 1
        %s277 = scalar_lea.sflag [#allocation6], %s276
        %s278 = sand.u32 %s92, 1
        %s279 = smul.addr %s278, 2
        %s280 = scalar_lea.vmem [#allocation5], %s279
        // Predicated region
        $region37: #{tpu_custom_call.1} parent=31 // pred_check
          %p281 = pneg %p105
        $region38: #{tpu_custom_call.1} parent=31 // pred_check_branch
          %283 = sbr.rel (%p281) target = $region40
        $region39: #{tpu_custom_call.1} parent=31 // pred_region
          %285 = dma.done %s277, 32
        $region40: #{tpu_custom_call.1} parent=31 // pred_fallthru
          _
        %s286 = sand.u32 %s23, 1
        %s287 = scalar_lea.sflag [#allocation6], %s286
        %s288 = sand.u32 %s126, 1
        %s289 = smul.addr %s288, 2
        %s290 = scalar_lea.vmem [#allocation7], %s289
        // Predicated region
        $region41: #{tpu_custom_call.1} parent=31 // pred_check
          %p291 = pneg %p139
        $region42: #{tpu_custom_call.1} parent=31 // pred_check_branch
          %293 = sbr.rel (%p291) target = $region44
        $region43: #{tpu_custom_call.1} parent=31 // pred_region
          %295 = dma.done %s287, 32
        $region44: #{tpu_custom_call.1} parent=31 // pred_fallthru
          _
        %s296 = sand.u32 %s58, 1
        %s297 = scalar_lea.sflag [#allocation3], %s296
        %s298 = sand.u32 %s58, 1
        %s299 = smul.addr %s298, 8
        %s300 = scalar_lea.vmem [#allocation2], %s299
        %p301 = pneg %p71
        %p302 = pneg %p68
        %s303 = sand.u32 %s23, 1
        %s304 = scalar_lea.sflag [#allocation6], %s303
        %s305 = sand.u32 %s92, 1
        %s306 = smul.addr %s305, 2
        %s307 = scalar_lea.vmem [#allocation5], %s306
        %p308 = pneg %p105
        %p309 = pneg %p102
        %s310 = sand.u32 %s23, 1
        %s311 = scalar_lea.sflag [#allocation6], %s310
        %s312 = sand.u32 %s126, 1
        %s313 = smul.addr %s312, 2
        %s314 = scalar_lea.vmem [#allocation7], %s313
        %p315 = pneg %p139
        %p316 = pneg %p136
        %p317 = pneg %p167
        %p318 = pneg %p164
        %s319 = sand.u32 %s154, 1
        %s320 = scalar_lea.sflag [#allocation4], %s319
        %s321 = sand.u32 %s154, 1
        %s322 = smul.addr %s321, 32
        %s323 = scalar_lea.vmem [#allocation8], %s322
        %s324 = sadd.s32 %s28, %s30
        %p325 = scmp.lt.s32.totalorder %s324, 0
        %s326 = scalar_select %p325, %s324, 0
        %s327 = smul.u32 2, %s326
        %s328 = sadd.s32 %s28, %s30
        %p329 = scmp.lt.s32.totalorder %s328, 0
        %s330 = scalar_select %p329, %s328, 0
        %s331 = smul.u32 2, %s330
        %s332 = sadd.s32 %s28, %s30
        %p333 = scmp.lt.s32.totalorder %s332, 0
        %s334 = scalar_select %p333, %s332, 0
        %s335 = smul.u32 2, %s334
        %s336 = sadd.s32 %s28, %s30
        %s337 = smul.u32 %s336, 256
        %v338 = vlaneseq
        %v339 = vshrl.u32 %v338, 7
        %v340 = vlaneseq
        %v341 = vand.u32 %v340, 127
        %v342 = vadd.s32 %v341, 128
        %v343 = vld [vmem:[%s270] sm:$0xff]
        %v344 = vld [vmem:[%s280] sm:$0x3]
        %v345 = vld [vmem:[%s290] sm:$0x3]
        %s346 = ssub.s32 256, %s337
        %s347 = ssub.s32 %s346, 0
        %v348 = vstv %s347
        %vm349 = vcmp.lt.s32.totalorder %v341, %v348
        %vm350 = vcmp.lt.s32.totalorder %v342, %v348
        %v351 = vsel %vm349, 1, 0
        %v352 = vsel %vm350, 1, 0
        %vm353 = vcmp.eq.s32.totalorder %v351, 1
        %vm354 = vcmp.eq.s32.totalorder %v352, 1
        %356 = vst [vmem:[#allocation1] ss:$2 sm:$0xff] %v343
        %v357 = vld.sshfl [vmem:[#allocation1] sm:$0xff pattern:$0x75316420]
        %v358 = vld.sshfl [vmem:[#allocation1 + $0x8] sm:$0xff pattern:$0x75316420]
        %v361 = vsel %vm353, %v357, 0.0
        %v362 = vsel %vm354, %v358, 0.0
        %v364 = vperm.slane %v345, 0
        %v365 = vperm.slane %v345, 1
        %v368 = vsel %vm349, %v364, 0.0
        %v369 = vsel %vm350, %v365, 0.0
        %v370 = vperm.slane %v344, 0
        %v371 = vperm.slane %v344, 1
        %vm372 = vcmp.eq.s32.totalorder %v339, %v370
        %vm373 = vcmp.eq.s32.totalorder %v339, %v371
        %vm374 = vmand %vm372, %vm353
        %vm375 = vmand %vm373, %vm354
        %v376 = vsel %vm374, 1.0, 0.0
        %v377 = vsel %vm375, 1.0, 0.0
        %378 = vst [vmem:[#allocation1] ss:$2 sm:$0xff] %v343
        %v379 = vld.sshfl [vmem:[#allocation1] sm:$0xff pattern:$0x75316420]
        %v380 = vld.sshfl [vmem:[#allocation1 + $0x8] sm:$0xff pattern:$0x75316420]
        %vm383 = vcmask 1043456
        %v384 = vsel %vm383, %v379, -inf
        %v385 = vrot.slane %v384, 4
        %v386 = vmax.f32 %v384, %v385
        %v387 = vrot.slane %v386, 2
        %v388 = vmax.f32 %v386, %v387
        %v389 = vrot.slane %v388, 1
        %v390 = vmax.f32 %v388, %v389
        %v391 = vsel %vm383, %v380, -inf
        %v392 = vrot.slane %v391, 4
        %v393 = vmax.f32 %v391, %v392
        %v394 = vrot.slane %v393, 2
        %v395 = vmax.f32 %v393, %v394
        %v396 = vrot.slane %v395, 1
        %v397 = vmax.f32 %v395, %v396
        %v400 = vrot.slane %v397, 4
        %v401 = vsel %vm383, %v390, %v400
        %vm403 = vcmp.eq.f32.partialorder %v343, %v401
        %v405 = vunpack.c.l.s4 839922192
        %v406 = vunpack.c.0.s8 %v405
        %v407 = vperm.slane %v339, %v406
        %v408 = vsel %vm403, %v407, 4
        %409 = vst [vmem:[#allocation1] ss:$2 sm:$0xff] %v408
        %v410 = vld.sshfl [vmem:[#allocation1] sm:$0xff pattern:$0x75316420]
        %v411 = vld.sshfl [vmem:[#allocation1 + $0x8] sm:$0xff pattern:$0x75316420]
        %v412 = vsel %vm383, %v410, 2147483647
        %v413 = vrot.slane %v412, 4
        %vm414 = vcmp.lt.s32.totalorder %v412, %v413
        %v415 = vsel %vm414, %v412, %v413
        %v416 = vrot.slane %v415, 2
        %vm417 = vcmp.lt.s32.totalorder %v415, %v416
        %v418 = vsel %vm417, %v415, %v416
        %v419 = vrot.slane %v418, 1
        %vm420 = vcmp.lt.s32.totalorder %v418, %v419
        %v421 = vsel %vm420, %v418, %v419
        %v422 = vsel %vm383, %v411, 2147483647
        %v423 = vrot.slane %v422, 4
        %vm424 = vcmp.lt.s32.totalorder %v422, %v423
        %v425 = vsel %vm424, %v422, %v423
        %v426 = vrot.slane %v425, 2
        %vm427 = vcmp.lt.s32.totalorder %v425, %v426
        %v428 = vsel %vm427, %v425, %v426
        %v429 = vrot.slane %v428, 1
        %vm430 = vcmp.lt.s32.totalorder %v428, %v429
        %v431 = vsel %vm430, %v428, %v429
        %vm432 = vcmp.ne.s32.totalorder %v421, %v370
        %vm433 = vcmp.ne.s32.totalorder %v431, %v371
        %vm434 = vmand %vm432, %vm349
        %vm435 = vmand %vm433, %vm350
        %v436 = vsel %vm434, 1.0, 0.0
        %v437 = vsel %vm435, 1.0, 0.0
        %v438 = vmul.f32 %v361, %v376
        %v439 = vmul.f32 %v362, %v377
        %v440 = vadd.f32 %v438, %v439
        %v441 = vadd.f32 %v440, 0.0
        %v442 = vadd.f32 %v361, %v362
        %v443 = vadd.f32 %v442, 0.0
        %v444 = vadd.f32 %v376, %v377
        %v445 = vadd.f32 %v444, 0.0
        %v446 = vmul.f32 %v368, %v436
        %v447 = vmul.f32 %v369, %v437
        %v448 = vadd.f32 %v446, %v447
        %v449 = vadd.f32 %v448, 0.0
        %v450 = vadd.f32 %v368, %v369
        %v451 = vadd.f32 %v450, 0.0
        %v452 = vadd.f32 %v436, %v437
        %v453 = vadd.f32 %v452, 0.0
        %p454 = scmp.eq.s32.totalorder %s30, 0
        // Predicated region
        $region45: #{tpu_custom_call.1} parent=31 // pred_check
          %p455 = pneg %p454
        $region46: #{tpu_custom_call.1} parent=31 // pred_check_branch
          %457 = sbr.rel (%p455) target = $region48
        $region47: #{tpu_custom_call.1} parent=31 // pred_region
          %458 = vst [vmem:[%s323] sm:$0xff] 0.0
          %459 = vst [vmem:[%s323 + $0x8] sm:$0xff] 0.0
          %460 = vst [vmem:[%s323 + $0x10] sm:$0xff] 0.0
          %461 = vst [vmem:[%s323 + $0x18] sm:$0xff] 0.0
        $region48: #{tpu_custom_call.1} parent=31 // pred_fallthru
          _
        %v462 = vld [vmem:[%s323] sm:$0xf]
        %v463 = vadd.f32 %v462, %v441
        %464 = vst [vmem:[%s323] sm:$0xf] %v463
        %v465 = vld [vmem:[%s323 + $0x8] sm:$0xf]
        %v466 = vadd.f32 %v465, %v443
        %467 = vst [vmem:[%s323 + $0x8] sm:$0xf] %v466
        %v468 = vld [vmem:[%s323 + $0x10] sm:$0xf]
        %v469 = vadd.f32 %v468, %v445
        %470 = vst [vmem:[%s323 + $0x10] sm:$0xf] %v469
        %v471 = vld [vmem:[%s323 + $0x18] sm:$0x1]
        %v472 = vadd.f32 %v471, %v449
        %473 = vst [vmem:[%s323 + $0x18] sm:$0x1] %v472
        %v474 = vld [vmem:[%s323 + $0x19] sm:$0x1]
        %v475 = vadd.f32 %v474, %v451
        %476 = vst [vmem:[%s323 + $0x19] sm:$0x1] %v475
        %v477 = vld [vmem:[%s323 + $0x1a] sm:$0x1]
        %v478 = vadd.f32 %v477, %v453
        %479 = vst [vmem:[%s323 + $0x1a] sm:$0x1] %v478
        %s480 = sand.u32 %s154, 1
        %s481 = scalar_lea.sflag [#allocation4], %s480
        %s482 = sand.u32 %s154, 1
        %s483 = smul.addr %s482, 32
        %s484 = scalar_lea.vmem [#allocation8], %s483
        // Predicated region
        $region49: #{tpu_custom_call.1} parent=31 // pred_check
          %p485 = pneg %p164
        $region50: #{tpu_custom_call.1} parent=31 // pred_check_branch
          %487 = sbr.rel (%p485) target = $region52
        $region51: #{tpu_custom_call.1} parent=31 // pred_region
          %489 = vsyncadd %s481, 0
          %s490 = smul.addr %s29, 4
          %s491 = smul.addr %s28, 8
          %s492 = sadd.s32 %s490, %s491
          %s493 = smul.addr %s492, 8
          %s494 = scalar_lea.hbm %s3, %s493
          %s495 = sshll.u32 %s484, 4
          %s496 = int_to_ptr.vmem [resolvable:$true] %s495
          %s497 = sshll.u32 %s494, 4
          %s498 = int_to_ptr.hbm [resolvable:$true] %s497
          %503 = dma.vmem_to_hbm [thread:$0]  %s496, 512, %s498, %s481, 128, 128, 8
        $region52: #{tpu_custom_call.1} parent=31 // pred_fallthru
          _
      $region32: #{tpu_custom_call.1} parent=5 // pred_fallthru
        _
      %p504 = scmp.le.s32.totalorder 2, %s18
      // Predicated region
      $region53: #{tpu_custom_call.1} parent=5 // pred_check
        %p505 = pneg %p504
      $region54: #{tpu_custom_call.1} parent=5 // pred_check_branch
        %507 = sbr.rel (%p505) target = $region56
      $region55: #{tpu_custom_call.1} parent=5 // pred_region
        %s508 = ssub.s32 %s18, 2
        // Predicated region
        $region57: #{tpu_custom_call.1} parent=55 // pred_check
          %p509 = pneg %p170
        $region58: #{tpu_custom_call.1} parent=55 // pred_check_branch
          %511 = sbr.rel (%p509) target = $region60
        $region59: #{tpu_custom_call.1} parent=55 // pred_region
          %s512 = sand.u32 %s155, 1
          %s513 = scalar_lea.sflag [#allocation4], %s512
          %s514 = sand.u32 %s155, 1
          %s515 = smul.addr %s514, 32
          %s516 = scalar_lea.vmem [#allocation8], %s515
          %518 = dma.done %s513, 512
        $region60: #{tpu_custom_call.1} parent=55 // pred_fallthru
          _
      $region56: #{tpu_custom_call.1} parent=5 // pred_fallthru
        _
    $region6: #{tpu_custom_call.1} parent=1 // loop_footer
      %s22 = sadd.s32 1, %s18
    $region7: #{tpu_custom_call.1} parent=1 // loop_footer_branch
      %17 = sbr.rel target = $region3
    $region8: #{tpu_custom_call.1} parent=1 // loop_exit
      _
    %519 = vsyncpa [#allocation3], 1
    %s520 = scalar_lea.sflag [#allocation3], 1
    %521 = vsyncpa %s520, 1
    %522 = vsyncpa [#allocation6], 1
    %s523 = scalar_lea.sflag [#allocation6], 1
    %524 = vsyncpa %s523, 1
    %525 = vsyncpa [#allocation4], 1
    %s526 = scalar_lea.sflag [#allocation4], 1
    %527 = vsyncpa %s526, 1

</llo_original>
